<compile_context>
chip_gen: v5e
topology: v5e:2x2
jax: 0.10.0
libtpu: 0.0.40
codegen_flags: <defaults>
</compile_context>

<pallas_src>
import math

import numpy as np
import jax
import jax.numpy as jnp
from jax import lax
from jax.experimental import pallas as pl
from jax.experimental.pallas import tpu as pltpu


def cdc_st_forward(x, weight, theta=0.6):
    """x: (N, C_in, T, H, W) NCTHW, weight: (C_out, C_in, KT, KH, KW). float32.

    Matches CDC_ST.forward with stride=1, dilation=1, groups=1, bias=False and
    spatial padding ((KH-1)//2, (KW-1)//2), temporal padding 0 (module default (0,1,1)).
    """
    N, C_in, T, H, W = x.shape
    C_out, C_in_w, KT, KH, KW = weight.shape
    assert C_in_w == C_in
    PH, PW = (KH - 1) // 2, (KW - 1) // 2
    T_norm = T - KT + 1                        # out_normal time length (no temporal pad)
    assert T_norm >= 1

    include_diff = (math.fabs(theta) >= 1e-8) and (KT > 1)
    if include_diff:
        # PyTorch broadcasting rule for out_normal - theta * out_diff along time:
        assert T_norm == T or T_norm == 1 or T == 1
        T_res = max(T_norm, T)
    else:
        T_res = T_norm                         # plain Conv3d branch of the module

    HW = H * W
    TC = T * C_in                              # fused (time, channel) contraction rows
    n_sp = KH * KW                             # spatial taps
    K_fused = n_sp * TC
    offsets = [(kh - PH, kw - PW) for kh in range(KH) for kw in range(KW)]

    # ---- wrapper-side layout plumbing (one copy of |x|): lane-dense activations ----
    # row index = tt*C_in + ci, lane index = flattened pixel h*W + w
    x_r = jnp.transpose(x, (0, 2, 1, 3, 4)).reshape(N, TC, HW).astype(jnp.float32)

    # ---- fused per-output-time weight: conv taps + (-theta * summed kernel) folded in ----
    kdiff = jnp.sum(weight, axis=(2, 3, 4)) if include_diff else None    # (C_out, C_in)

    def build_wt(t):
        tn = t if T_norm > 1 else 0            # out_normal time broadcast
        td = t if T > 1 else 0                 # out_diff time broadcast
        sp_blocks = []
        for kh in range(KH):
            for kw in range(KW):
                cols = []
                for tt in range(T):
                    col = jnp.zeros((C_out, C_in), jnp.float32)
                    if tn <= tt < tn + KT:
                        col = weight[:, :, tt - tn, kh, kw].astype(jnp.float32)
                    if include_diff and kh == PH and kw == PW and tt == td:
                        col = col + (-float(theta)) * kdiff.astype(jnp.float32)
                    cols.append(col)
                sp_blocks.append(jnp.stack(cols, axis=1))        # (C_out, T, C_in)
        return jnp.stack(sp_blocks, axis=1)                      # (C_out, n_sp, T, C_in)

    w_big = jnp.stack([build_wt(t) for t in range(T_res)], axis=0)
    w_big = w_big.reshape(T_res, C_out, K_fused)                 # column = s*TC + tt*C_in + ci

    # ---- spatial-boundary masks per tap (pure-numpy constants, loaded once, resident) ----
    hh, ww = np.meshgrid(np.arange(H), np.arange(W), indexing="ij")
    mask_np = np.empty((n_sp, HW), np.float32)
    for s, (dh, dw) in enumerate(offsets):
        valid = (hh + dh >= 0) & (hh + dh < H) & (ww + dw >= 0) & (ww + dw < W)
        mask_np[s] = valid.reshape(-1).astype(np.float32)
    masks = jnp.asarray(mask_np)                                 # (n_sp, HW)

    # ---- kernel: build the im2col slab in VMEM (XLU rolls + masks), one MXU matmul ----
    def kernel(w_ref, m_ref, x_ref, o_ref):
        # w_ref: (C_out, K_fused)   fused weight for this output time step
        # m_ref: (n_sp, HW)         boundary masks (constant, stays resident)
        # x_ref: (T*C_in, HW)       all time steps of one image, loaded once per n
        # o_ref: (C_out, HW)        lane-dense output block
        xb = x_ref[...]
        mb = m_ref[...]
        pieces = []
        for s, (dh, dw) in enumerate(offsets):
            off = dh * W + dw
            # out[p] needs x[p + off]; pltpu.roll(x, s)[p] == x[(p - s) mod HW]
            xs = xb if off == 0 else pltpu.roll(xb, shift=(-off) % HW, axis=1)
            if (dh, dw) != (0, 0):
                xs = xs * mb[s:s + 1, :]       # zero out-of-image neighbours
            pieces.append(xs)
        slab = jnp.concatenate(pieces, axis=0)                   # (K_fused, HW) in VMEM
        o_ref[...] = jnp.dot(w_ref[...], slab,
                             preferred_element_type=jnp.float32).astype(o_ref.dtype)

    grid = (N, T_res)                          # t innermost -> x block stays resident per n
    out_r = pl.pallas_call(
        kernel,
        out_shape=jax.ShapeDtypeStruct((N, T_res, C_out, HW), jnp.float32),
        grid=grid,
        in_specs=[
            pl.BlockSpec((None, C_out, K_fused), lambda n, t: (t, 0, 0)),   # per-t weight
            pl.BlockSpec((n_sp, HW), lambda n, t: (0, 0)),                  # masks (resident)
            pl.BlockSpec((None, TC, HW), lambda n, t: (n, 0, 0)),           # image (per-n)
        ],
        out_specs=pl.BlockSpec((None, None, C_out, HW), lambda n, t: (n, t, 0, 0)),
        compiler_params=pltpu.CompilerParams(
            dimension_semantics=("parallel", "parallel")),
    )(w_big, masks, x_r)

    out = out_r.reshape(N, T_res, C_out, H, W)
    return jnp.transpose(out, (0, 2, 1, 3, 4))                   # (N, C_out, T_res, H, W)


def cdc_st_reference(x, weight, theta=0.6):
    """Pure-JAX reference matching the PyTorch CDC_ST.forward."""
    KH, KW = weight.shape[3], weight.shape[4]
    PH, PW = (KH - 1) // 2, (KW - 1) // 2
    out_normal = lax.conv_general_dilated(
        x, weight, window_strides=(1, 1, 1),
        padding=((0, 0), (PH, PH), (PW, PW)),
        dimension_numbers=("NCDHW", "OIDHW", "NCDHW"))
    if math.fabs(theta) < 1e-8 or weight.shape[2] <= 1:
        return out_normal
    kdiff = jnp.sum(weight, axis=(2, 3, 4))[:, :, None, None, None]
    out_diff = lax.conv_general_dilated(
        x, kdiff, window_strides=(1, 1, 1),
        padding=((0, 0), (0, 0), (0, 0)),
        dimension_numbers=("NCDHW", "OIDHW", "NCDHW"))
    return out_normal - theta * out_diff       # broadcasts along the time dim


if __name__ == "__main__":
    # Small shapes consistent with the module defaults: kernel=(2,3,3), padding=(0,1,1),
    # x_in = stack([xc, xt], dim=2) -> T = 2.
    N, C_in, C_out = 2, 4, 8
    T, H, W = 2, 16, 16
    KT, KH, KW = 2, 3, 3
    theta = 0.6

    key = jax.random.PRNGKey(0)
    kx, kw = jax.random.split(key)
    x = jax.random.normal(kx, (N, C_in, T, H, W), dtype=jnp.float32)
    weight = 0.1 * jax.random.normal(kw, (C_out, C_in, KT, KH, KW), dtype=jnp.float32)

    # Central-difference branch (theta != 0, KT > 1).
    out = jax.block_until_ready(cdc_st_forward(x, weight, theta))
    ref = jax.block_until_ready(cdc_st_reference(x, weight, theta))
    assert out.shape == ref.shape, (out.shape, ref.shape)
    np.testing.assert_allclose(np.asarray(out), np.asarray(ref), rtol=1e-4, atol=1e-4)

    # Plain-conv early-return branch (theta == 0).
    out0 = jax.block_until_ready(cdc_st_forward(x, weight, 0.0))
    ref0 = jax.block_until_ready(cdc_st_reference(x, weight, 0.0))
    assert out0.shape == ref0.shape, (out0.shape, ref0.shape)
    np.testing.assert_allclose(np.asarray(out0), np.asarray(ref0), rtol=1e-4, atol=1e-4)

    print("KERNEL_OK")
</pallas_src>

<mosaic_0001>
module attributes {stable_mosaic.version = 11 : i64} {
  func.func @kernel(%arg0: i32, %arg1: i32, %arg2: memref<1x8x72xf32, #tpu.memory_space<vmem>>, %arg3: memref<9x256xf32, #tpu.memory_space<vmem>>, %arg4: memref<1x8x256xf32, #tpu.memory_space<vmem>>, %arg5: memref<1x1x8x256xf32, #tpu.memory_space<vmem>>) attributes {dimension_semantics = [#tpu.dimension_semantics<parallel>, #tpu.dimension_semantics<parallel>], iteration_bounds = array<i64: 2, 2>, scalar_prefetch = 0 : i64, scratch_operands = 0 : i64, tpu.core_type = #tpu.core_type<tc>, window_params = [{transform_indices = @transform_0, window_bounds = array<i64: 1, 8, 72>}, {pipeline_mode = #tpu.pipeline_mode<synchronous>, transform_indices = @transform_1, window_bounds = array<i64: 9, 256>}, {transform_indices = @transform_2, window_bounds = array<i64: 1, 8, 256>}, {transform_indices = @transform_3, window_bounds = array<i64: 1, 1, 8, 256>}]} {
    %c0 = arith.constant 0 : index
    %c0_0 = arith.constant 0 : index
    %c0_1 = arith.constant 0 : index
    %0 = vector.load %arg4[%c0, %c0_0, %c0_1] : memref<1x8x256xf32, #tpu.memory_space<vmem>>, vector<1x8x256xf32>
    %1 = vector.shape_cast %0 : vector<1x8x256xf32> to vector<8x256xf32>
    %c0_2 = arith.constant 0 : index
    %c0_3 = arith.constant 0 : index
    %2 = vector.load %arg3[%c0_2, %c0_3] : memref<9x256xf32, #tpu.memory_space<vmem>>, vector<9x256xf32>
    %c17_i32 = arith.constant 17 : i32
    %3 = tpu.dynamic_rotate %1 by %c17_i32 dim 1 : vector<8x256xf32>, i32 -> vector<8x256xf32>
    %4 = vector.extract_strided_slice %2 {offsets = [0, 0], sizes = [1, 256], strides = [1, 1]} : vector<9x256xf32> to vector<1x256xf32>
    %5 = vector.broadcast %4 : vector<1x256xf32> to vector<8x256xf32>
    %6 = arith.mulf %3, %5 : vector<8x256xf32>
    %c16_i32 = arith.constant 16 : i32
    %7 = tpu.dynamic_rotate %1 by %c16_i32 dim 1 : vector<8x256xf32>, i32 -> vector<8x256xf32>
    %8 = vector.extract_strided_slice %2 {offsets = [1, 0], sizes = [1, 256], strides = [1, 1]} : vector<9x256xf32> to vector<1x256xf32>
    %9 = vector.broadcast %8 : vector<1x256xf32> to vector<8x256xf32>
    %10 = arith.mulf %7, %9 : vector<8x256xf32>
    %c15_i32 = arith.constant 15 : i32
    %11 = tpu.dynamic_rotate %1 by %c15_i32 dim 1 : vector<8x256xf32>, i32 -> vector<8x256xf32>
    %12 = vector.extract_strided_slice %2 {offsets = [2, 0], sizes = [1, 256], strides = [1, 1]} : vector<9x256xf32> to vector<1x256xf32>
    %13 = vector.broadcast %12 : vector<1x256xf32> to vector<8x256xf32>
    %14 = arith.mulf %11, %13 : vector<8x256xf32>
    %c1_i32 = arith.constant 1 : i32
    %15 = tpu.dynamic_rotate %1 by %c1_i32 dim 1 : vector<8x256xf32>, i32 -> vector<8x256xf32>
    %16 = vector.extract_strided_slice %2 {offsets = [3, 0], sizes = [1, 256], strides = [1, 1]} : vector<9x256xf32> to vector<1x256xf32>
    %17 = vector.broadcast %16 : vector<1x256xf32> to vector<8x256xf32>
    %18 = arith.mulf %15, %17 : vector<8x256xf32>
    %c255_i32 = arith.constant 255 : i32
    %19 = tpu.dynamic_rotate %1 by %c255_i32 dim 1 : vector<8x256xf32>, i32 -> vector<8x256xf32>
    %20 = vector.extract_strided_slice %2 {offsets = [5, 0], sizes = [1, 256], strides = [1, 1]} : vector<9x256xf32> to vector<1x256xf32>
    %21 = vector.broadcast %20 : vector<1x256xf32> to vector<8x256xf32>
    %22 = arith.mulf %19, %21 : vector<8x256xf32>
    %c241_i32 = arith.constant 241 : i32
    %23 = tpu.dynamic_rotate %1 by %c241_i32 dim 1 : vector<8x256xf32>, i32 -> vector<8x256xf32>
    %24 = vector.extract_strided_slice %2 {offsets = [6, 0], sizes = [1, 256], strides = [1, 1]} : vector<9x256xf32> to vector<1x256xf32>
    %25 = vector.broadcast %24 : vector<1x256xf32> to vector<8x256xf32>
    %26 = arith.mulf %23, %25 : vector<8x256xf32>
    %c240_i32 = arith.constant 240 : i32
    %27 = tpu.dynamic_rotate %1 by %c240_i32 dim 1 : vector<8x256xf32>, i32 -> vector<8x256xf32>
    %28 = vector.extract_strided_slice %2 {offsets = [7, 0], sizes = [1, 256], strides = [1, 1]} : vector<9x256xf32> to vector<1x256xf32>
    %29 = vector.broadcast %28 : vector<1x256xf32> to vector<8x256xf32>
    %30 = arith.mulf %27, %29 : vector<8x256xf32>
    %c239_i32 = arith.constant 239 : i32
    %31 = tpu.dynamic_rotate %1 by %c239_i32 dim 1 : vector<8x256xf32>, i32 -> vector<8x256xf32>
    %32 = vector.extract_strided_slice %2 {offsets = [8, 0], sizes = [1, 256], strides = [1, 1]} : vector<9x256xf32> to vector<1x256xf32>
    %33 = vector.broadcast %32 : vector<1x256xf32> to vector<8x256xf32>
    %34 = arith.mulf %31, %33 : vector<8x256xf32>
    %35 = tpu.concatenate %6, %10, %14, %18, %1, %22, %26, %30, %34 in 0 : vector<8x256xf32>, vector<8x256xf32>, vector<8x256xf32>, vector<8x256xf32>, vector<8x256xf32>, vector<8x256xf32>, vector<8x256xf32>, vector<8x256xf32>, vector<8x256xf32> -> vector<72x256xf32>
    %c0_4 = arith.constant 0 : index
    %c0_5 = arith.constant 0 : index
    %c0_6 = arith.constant 0 : index
    %36 = vector.load %arg2[%c0_4, %c0_5, %c0_6] : memref<1x8x72xf32, #tpu.memory_space<vmem>>, vector<1x8x72xf32>
    %37 = vector.shape_cast %36 : vector<1x8x72xf32> to vector<8x72xf32>
    %cst = arith.constant dense<0.000000e+00> : vector<8x256xf32>
    %38 = tpu.matmul %37, %35, %cst {dimension_numbers = #tpu.dot_dimension_numbers<[1], [0], [0], [1], [0, 0, 1, 1], [], []>} : vector<8x72xf32>, vector<72x256xf32>, vector<8x256xf32> -> vector<8x256xf32>
    %c0_7 = arith.constant 0 : index
    %c0_8 = arith.constant 0 : index
    %c0_9 = arith.constant 0 : index
    %c0_10 = arith.constant 0 : index
    %39 = vector.load %arg5[%c0_7, %c0_8, %c0_9, %c0_10] : memref<1x1x8x256xf32, #tpu.memory_space<vmem>>, vector<1x1x8x256xf32>
    %40 = vector.shape_cast %39 : vector<1x1x8x256xf32> to vector<8x256xf32>
    %41 = vector.shape_cast %38 : vector<8x256xf32> to vector<1x1x8x256xf32>
    tpu.vector_store %arg5[%c0_7, %c0_8, %c0_9, %c0_10], %41 {strides = array<i32>} : memref<1x1x8x256xf32, #tpu.memory_space<vmem>>, vector<1x1x8x256xf32>,
    return
  }
  func.func @transform_0(%arg0: i32, %arg1: i32) -> (i32, i32, i32) {
    %c0_i32 = arith.constant 0 : i32
    %c0_i32_0 = arith.constant 0 : i32
    %c0_i32_1 = arith.constant 0 : i32
    return %arg1, %c0_i32, %c0_i32_0 : i32, i32, i32
  }
  func.func @transform_1(%arg0: i32, %arg1: i32) -> (i32, i32) {
    %c0_i32 = arith.constant 0 : i32
    %c0_i32_0 = arith.constant 0 : i32
    %c0_i32_1 = arith.constant 0 : i32
    return %c0_i32, %c0_i32_0 : i32, i32
  }
  func.func @transform_2(%arg0: i32, %arg1: i32) -> (i32, i32, i32) {
    %c0_i32 = arith.constant 0 : i32
    %c0_i32_0 = arith.constant 0 : i32
    %c0_i32_1 = arith.constant 0 : i32
    return %arg0, %c0_i32, %c0_i32_0 : i32, i32, i32
  }
  func.func @transform_3(%arg0: i32, %arg1: i32) -> (i32, i32, i32, i32) {
    %c0_i32 = arith.constant 0 : i32
    %c0_i32_0 = arith.constant 0 : i32
    %c0_i32_1 = arith.constant 0 : i32
    return %arg0, %arg1, %c0_i32, %c0_i32_0 : i32, i32, i32, i32
  }
}

</mosaic_0001>

<llo_original>
// kernel: tpu_custom_call.1
$region0: #{tpu_custom_call.1}
  #allocation0 [shape = 'u32[]', space=smem, size = 0x4, offset = 0x4, fixed_abs, tag = 'smem constant byte address 0x4 - core index']
  #allocation1 [shape = 'u32[72,128]{1,0:T(1,128)}', space=vmem, size = 0x9000, scoped, tag = 'internal scratch']
  %s0 = inlined_call_operand.hbm [shape: f32[2,8,72], index: 0, kind: input, shape index: {}]
  %s1 = inlined_call_operand.hbm [shape: f32[9,256], index: 1, kind: input, shape index: {}]
  %s2 = inlined_call_operand.hbm [shape: f32[2,8,256], index: 2, kind: input, shape index: {}]
  %s3 = inlined_call_operand.hbm [shape: f32[2,2,8,256], index: 3, kind: output, shape index: {}]
  %s4 = sld [smem:[#allocation0]]
  $region57: #{tpu_custom_call.1} parent=0
    _
  %s6 = ssub.s32 1, %s4
  %s7 = scalar_select 0, %s6, %s4
  $region1: #{tpu_custom_call.1} parent=0
    #allocation2 [shape = 'u8[8192]{0}', space=vmem, size = 0x2000, scoped, tag = 'input window, operand 0']
    #allocation3 [shape = 's32[2]{0}', space=sflag, size = 0x8, scoped, tag = 'scoped memory for tpu_custom_call.1']
    #allocation4 [shape = 's32[2]{0}', space=sflag, size = 0x8, scoped, tag = 'scoped memory for tpu_custom_call.1']
    #allocation5 [shape = 'u8[16384]{0}', space=vmem, size = 0x4000, scoped, tag = 'input window, operand 1, single buffered']
    #allocation6 [shape = 's32[1]{0}', space=sflag, size = 0x4, scoped, tag = 'scoped memory for tpu_custom_call.1']
    #allocation7 [shape = 'u8[16384]{0}', space=vmem, size = 0x4000, scoped, tag = 'input window, operand 2']
    #allocation8 [shape = 'u8[16384]{0}', space=vmem, size = 0x4000, scoped, tag = 'output window, operand 0']
    %8 = vsyncpa [#allocation3], 0
    %s9 = scalar_lea.sflag [#allocation3], 1
    %10 = vsyncpa %s9, 0
    %11 = vsyncpa [#allocation6], 0
    %12 = vsyncpa [#allocation4], 0
    %s13 = scalar_lea.sflag [#allocation4], 1
    %14 = vsyncpa %s13, 0
    loop: start=0, step=1, limit=6
    $region2: #{tpu_custom_call.1} parent=1 // loop_pre_header
      _
    $region3: #{tpu_custom_call.1} parent=1 // loop_header
      %s16 = sphi 0, %s20
      %p17 = scmp.ge.s32.totalorder %s16, 6
      %s23 = sphi 0, %s35
      %s24 = sphi 0, %s31
      %s25 = sphi 0, %s23
      %s26 = sphi 0, %s24
      %s27 = sphi 0, %s25
      %s28 = sphi 0, %s26
      %s38 = sphi 0, %s40
      %s41 = sphi 0, %s38
      %s42 = sphi 0, %s41
      %s58 = sphi 0, %s42
      %s62 = sphi 0, %s62
      %s64 = sphi 0, %s62
      %s65 = sphi 0, %s64
      %s79 = sphi 0, %s65
      %s85 = sphi 0, %s87
      %s88 = sphi 0, %s85
      %s89 = sphi 0, %s88
      %s105 = sphi 0, %s89
      %s113 = sphi 0, %s115
      %s116 = sphi 0, %s113
      %s117 = sphi 0, %s116
      %s133 = sphi 0, %s117
    $region4: #{tpu_custom_call.1} parent=1 // loop_header_branch
      %19 = sbr.rel (%p17) target = $region8
    $region5: #{tpu_custom_call.1} parent=1 // loop_body
      %s21 = ssub.s32 %s16, 1
      %s22 = ssub.s32 %s16, 2
      %s29 = sadd.s32 1, %s24
      %p30 = scmp.ge.s32.totalorder %s29, 2
      %s31 = scalar_select %p30, 0, %s29
      %s32 = sadd.s32 1, %s23
      %s33 = scalar_select %p30, %s32, %s23
      %p34 = scmp.ge.s32.totalorder %s33, 2
      %s35 = scalar_select %p34, 0, %s33
      %s36 = ssub.s32 %s24, %s31
      %p37 = scmp.eq.s32.totalorder %s36, 0
      %s39 = sadd.s32 %s38, 1
      %s40 = scalar_select %p37, %s38, %s39
      %p43 = pneg %p37
      %p44 = scmp.eq.s32.totalorder %s16, 3
      %p45 = por %p43, %p44
      %p46 = scmp.ne.s32.totalorder %s38, %s41
      %p47 = scmp.eq.s32.totalorder %s16, 0
      %p48 = por %p46, %p47
      %p49 = scmp.ne.s32.totalorder %s38, %s41
      %p50 = scmp.eq.s32.totalorder %s21, 3
      %p51 = por %p49, %p50
      %p52 = scmp.ne.s32.totalorder %s41, %s42
      %p53 = scmp.eq.s32.totalorder %s21, 0
      %p54 = por %p52, %p53
      %p55 = scmp.ne.s32.totalorder %s41, %s42
      %p56 = scmp.eq.s32.totalorder %s22, 3
      %p57 = por %p55, %p56
      %p59 = scmp.ne.s32.totalorder %s42, %s58
      %p60 = scmp.eq.s32.totalorder %s22, 0
      %p61 = por %p59, %p60
      %s63 = sadd.s32 %s62, 1
      %p66 = scmp.eq.s32.totalorder %s16, 3
      %p67 = scmp.ne.s32.totalorder %s62, %s64
      %p68 = scmp.eq.s32.totalorder %s16, 0
      %p69 = por %p67, %p68
      %p70 = scmp.ne.s32.totalorder %s62, %s64
      %p71 = scmp.eq.s32.totalorder %s21, 3
      %p72 = por %p70, %p71
      %p73 = scmp.ne.s32.totalorder %s64, %s65
      %p74 = scmp.eq.s32.totalorder %s21, 0
      %p75 = por %p73, %p74
      %p76 = scmp.ne.s32.totalorder %s64, %s65
      %p77 = scmp.eq.s32.totalorder %s22, 3
      %p78 = por %p76, %p77
      %p80 = scmp.ne.s32.totalorder %s65, %s79
      %p81 = scmp.eq.s32.totalorder %s22, 0
      %p82 = por %p80, %p81
      %s83 = ssub.s32 %s23, %s35
      %p84 = scmp.eq.s32.totalorder %s83, 0
      %s86 = sadd.s32 %s85, 1
      %s87 = scalar_select %p84, %s85, %s86
      %p90 = pneg %p84
      %p91 = scmp.eq.s32.totalorder %s16, 3
      %p92 = por %p90, %p91
      %p93 = scmp.ne.s32.totalorder %s85, %s88
      %p94 = scmp.eq.s32.totalorder %s16, 0
      %p95 = por %p93, %p94
      %p96 = scmp.ne.s32.totalorder %s85, %s88
      %p97 = scmp.eq.s32.totalorder %s21, 3
      %p98 = por %p96, %p97
      %p99 = scmp.ne.s32.totalorder %s88, %s89
      %p100 = scmp.eq.s32.totalorder %s21, 0
      %p101 = por %p99, %p100
      %p102 = scmp.ne.s32.totalorder %s88, %s89
      %p103 = scmp.eq.s32.totalorder %s22, 3
      %p104 = por %p102, %p103
      %p106 = scmp.ne.s32.totalorder %s89, %s105
      %p107 = scmp.eq.s32.totalorder %s22, 0
      %p108 = por %p106, %p107
      %s109 = ssub.s32 %s23, %s35
      %s110 = ssub.s32 %s24, %s31
      %s111 = sor.u32 %s109, %s110
      %p112 = scmp.eq.s32.totalorder %s111, 0
      %s114 = sadd.s32 %s113, 1
      %s115 = scalar_select %p112, %s113, %s114
      %p118 = pneg %p112
      %p119 = scmp.eq.s32.totalorder %s16, 3
      %p120 = por %p118, %p119
      %p121 = scmp.ne.s32.totalorder %s113, %s116
      %p122 = scmp.eq.s32.totalorder %s16, 0
      %p123 = por %p121, %p122
      %p124 = scmp.ne.s32.totalorder %s113, %s116
      %p125 = scmp.eq.s32.totalorder %s21, 3
      %p126 = por %p124, %p125
      %p127 = scmp.ne.s32.totalorder %s116, %s117
      %p128 = scmp.eq.s32.totalorder %s21, 0
      %p129 = por %p127, %p128
      %p130 = scmp.ne.s32.totalorder %s116, %s117
      %p131 = scmp.eq.s32.totalorder %s22, 3
      %p132 = por %p130, %p131
      %p134 = scmp.ne.s32.totalorder %s117, %s133
      %p135 = scmp.eq.s32.totalorder %s22, 0
      %p136 = por %p134, %p135
      %p137 = scmp.le.s32.totalorder 1, %s16
      %p138 = scmp.lt.s32.totalorder %s16, 5
      %p139 = pnand %p137, %p138
      %p140 = pneg %p139
      // Predicated region
      $region9: #{tpu_custom_call.1} parent=5 // pred_check
        _
      $region10: #{tpu_custom_call.1} parent=5 // pred_check_branch
        %142 = sbr.rel (%p139) target = $region12
      $region11: #{tpu_custom_call.1} parent=5 // pred_region
        %s143 = ssub.s32 %s16, 1
        // Predicated region
        $region13: #{tpu_custom_call.1} parent=11 // pred_check
          %p144 = pneg %p75
        $region14: #{tpu_custom_call.1} parent=11 // pred_check_branch
          %146 = sbr.rel (%p144) target = $region16
        $region15: #{tpu_custom_call.1} parent=11 // pred_region
          %148 = vsyncadd [#allocation6], 0
          %s149 = sshll.u32 %s1, 4
          %s150 = int_to_ptr.hbm [resolvable:$true] %s149
          %s151 = sshll.u32 [#allocation5], 4
          %s152 = int_to_ptr.vmem [resolvable:$true] %s151
          %157 = dma.hbm_to_vmem [thread:$0]  %s150, 512, %s152, [#allocation6], 256, 256, 16
        $region16: #{tpu_custom_call.1} parent=11 // pred_fallthru
          _
      $region12: #{tpu_custom_call.1} parent=5 // pred_fallthru
        _
      %p158 = scmp.lt.s32.totalorder %s16, 4
      // Predicated region
      $region17: #{tpu_custom_call.1} parent=5 // pred_check
        %p159 = pneg %p158
      $region18: #{tpu_custom_call.1} parent=5 // pred_check_branch
        %161 = sbr.rel (%p159) target = $region20
      $region19: #{tpu_custom_call.1} parent=5 // pred_region
        // Predicated region
        $region21: #{tpu_custom_call.1} parent=19 // pred_check
          %p162 = pneg %p48
        $region22: #{tpu_custom_call.1} parent=19 // pred_check_branch
          %164 = sbr.rel (%p162) target = $region24
        $region23: #{tpu_custom_call.1} parent=19 // pred_region
          %s165 = sand.u32 %s16, 1
          %s166 = scalar_lea.sflag [#allocation3], %s165
          %s167 = sand.u32 %s38, 1
          %s168 = smul.addr %s167, 8
          %s169 = scalar_lea.vmem [#allocation2], %s168
          %171 = vsyncadd %s166, 0
          %s172 = smul.addr %s24, 8
          %s173 = scalar_lea.hbm %s0, %s172
          %s175 = sshll.u32 %s173, 4
          %s176 = int_to_ptr.hbm [resolvable:$true] %s175
          %s177 = sshll.u32 %s169, 4
          %s178 = int_to_ptr.vmem [resolvable:$true] %s177
          %180 = dma.hbm_to_vmem [thread:$0]  %s176, 128, %s178, %s166
        $region24: #{tpu_custom_call.1} parent=19 // pred_fallthru
          _
        // Predicated region
        $region25: #{tpu_custom_call.1} parent=19 // pred_check
          %p181 = pneg %p95
        $region26: #{tpu_custom_call.1} parent=19 // pred_check_branch
          %183 = sbr.rel (%p181) target = $region28
        $region27: #{tpu_custom_call.1} parent=19 // pred_region
          %s184 = sand.u32 %s16, 1
          %s185 = scalar_lea.sflag [#allocation3], %s184
          %s186 = sand.u32 %s85, 1
          %s187 = smul.addr %s186, 16
          %s188 = scalar_lea.vmem [#allocation7], %s187
          %190 = vsyncadd %s185, 0
          %s191 = smul.addr %s23, 2
          %s192 = smul.addr %s191, 8
          %s193 = scalar_lea.hbm %s2, %s192
          %s195 = sshll.u32 %s193, 4
          %s196 = int_to_ptr.hbm [resolvable:$true] %s195
          %s197 = sshll.u32 %s188, 4
          %s198 = int_to_ptr.vmem [resolvable:$true] %s197
          %200 = dma.hbm_to_vmem [thread:$0]  %s196, 256, %s198, %s185
        $region28: #{tpu_custom_call.1} parent=19 // pred_fallthru
          _
      $region20: #{tpu_custom_call.1} parent=5 // pred_fallthru
        _
      %p201 = scmp.le.s32.totalorder 1, %s16
      %p202 = scmp.lt.s32.totalorder %s16, 5
      %p203 = pnand %p201, %p202
      %p204 = pneg %p203
      // Predicated region
      $region29: #{tpu_custom_call.1} parent=5 // pred_check
        _
      $region30: #{tpu_custom_call.1} parent=5 // pred_check_branch
        %206 = sbr.rel (%p203) target = $region32
      $region31: #{tpu_custom_call.1} parent=5 // pred_region
        %s207 = ssub.s32 %s16, 1
        %s208 = sand.u32 %s21, 1
        %s209 = scalar_lea.sflag [#allocation3], %s208
        %s210 = sand.u32 %s41, 1
        %s211 = smul.addr %s210, 8
        %s212 = scalar_lea.vmem [#allocation2], %s211
        // Predicated region
        $region33: #{tpu_custom_call.1} parent=31 // pred_check
          %p213 = pneg %p54
        $region34: #{tpu_custom_call.1} parent=31 // pred_check_branch
          %215 = sbr.rel (%p213) target = $region36
        $region35: #{tpu_custom_call.1} parent=31 // pred_region
          %217 = dma.done %s209, 128
        $region36: #{tpu_custom_call.1} parent=31 // pred_fallthru
          _
        // Predicated region
        $region37: #{tpu_custom_call.1} parent=31 // pred_check
          %p218 = pneg %p75
        $region38: #{tpu_custom_call.1} parent=31 // pred_check_branch
          %220 = sbr.rel (%p218) target = $region40
        $region39: #{tpu_custom_call.1} parent=31 // pred_region
          %222 = dma.done [#allocation6], 512
        $region40: #{tpu_custom_call.1} parent=31 // pred_fallthru
          _
        %s223 = sand.u32 %s21, 1
        %s224 = scalar_lea.sflag [#allocation3], %s223
        %s225 = sand.u32 %s88, 1
        %s226 = smul.addr %s225, 16
        %s227 = scalar_lea.vmem [#allocation7], %s226
        // Predicated region
        $region41: #{tpu_custom_call.1} parent=31 // pred_check
          %p228 = pneg %p101
        $region42: #{tpu_custom_call.1} parent=31 // pred_check_branch
          %230 = sbr.rel (%p228) target = $region44
        $region43: #{tpu_custom_call.1} parent=31 // pred_region
          %232 = dma.done %s224, 256
        $region44: #{tpu_custom_call.1} parent=31 // pred_fallthru
          _
        %s233 = sand.u32 %s21, 1
        %s234 = scalar_lea.sflag [#allocation3], %s233
        %s235 = sand.u32 %s41, 1
        %s236 = smul.addr %s235, 8
        %s237 = scalar_lea.vmem [#allocation2], %s236
        %p238 = pneg %p54
        %p239 = pneg %p51
        %p240 = pneg %p75
        %p241 = pneg %p72
        %s242 = sand.u32 %s21, 1
        %s243 = scalar_lea.sflag [#allocation3], %s242
        %s244 = sand.u32 %s88, 1
        %s245 = smul.addr %s244, 16
        %s246 = scalar_lea.vmem [#allocation7], %s245
        %p247 = pneg %p101
        %p248 = pneg %p98
        %p249 = pneg %p129
        %p250 = pneg %p126
        %s251 = sand.u32 %s116, 1
        %s252 = scalar_lea.sflag [#allocation4], %s251
        %s253 = sand.u32 %s116, 1
        %s254 = smul.addr %s253, 16
        %s255 = scalar_lea.vmem [#allocation8], %s254
        %v256 = vld [vmem:[%s227] sm:$0xff]
        %v257 = vld [vmem:[%s227 + $0x8] sm:$0xff]
        %v258 = vld [vmem:[#allocation5] sm:$0xff]
        %v259 = vld [vmem:[#allocation5 + $0x8] sm:$0xff]
        %v260 = vld [vmem:[#allocation5 + $0x10] sm:$0x1]
        %v261 = vld [vmem:[#allocation5 + $0x18] sm:$0x1]
        %262 = vrot.lane.b32.xlu0 %v256, 17
        %v263 = vpop.permute.xlu0 %262
        %264 = vrot.lane.b32.xlu0 %v257, 17
        %v265 = vpop.permute.xlu0 %264
        %v266 = vlaneseq
        %v267 = vand.u32 %v266, 127
        %vm268 = vcmp.lt.s32.totalorder %v267, 17
        %v269 = vsel %vm268, %v263, %v265
        %v270 = vsel %vm268, %v265, %v263
        %v271 = vperm.slane %v258, 0
        %v272 = vperm.slane %v259, 0
        %v273 = vmul.f32 %v270, %v271
        %v274 = vmul.f32 %v269, %v272
        %275 = vrot.lane.b32.xlu0 %v256, 16
        %v276 = vpop.permute.xlu0 %275
        %277 = vrot.lane.b32.xlu0 %v257, 16
        %v278 = vpop.permute.xlu0 %277
        %vm279 = vcmp.lt.s32.totalorder %v267, 16
        %v280 = vsel %vm279, %v276, %v278
        %v281 = vsel %vm279, %v278, %v276
        %v282 = vperm.slane %v258, 1
        %v283 = vperm.slane %v259, 1
        %v284 = vmul.f32 %v281, %v282
        %v285 = vmul.f32 %v280, %v283
        %286 = vrot.lane.b32.xlu0 %v256, 15
        %v287 = vpop.permute.xlu0 %286
        %288 = vrot.lane.b32.xlu0 %v257, 15
        %v289 = vpop.permute.xlu0 %288
        %vm290 = vcmp.lt.s32.totalorder %v267, 15
        %v291 = vsel %vm290, %v287, %v289
        %v292 = vsel %vm290, %v289, %v287
        %v293 = vperm.slane %v258, 2
        %v294 = vperm.slane %v259, 2
        %v295 = vmul.f32 %v292, %v293
        %v296 = vmul.f32 %v291, %v294
        %297 = vrot.lane.b32.xlu0 %v256, 1
        %v298 = vpop.permute.xlu0 %297
        %299 = vrot.lane.b32.xlu0 %v257, 1
        %v300 = vpop.permute.xlu0 %299
        %vm301 = vcmp.lt.s32.totalorder %v267, 1
        %v302 = vsel %vm301, %v298, %v300
        %v303 = vsel %vm301, %v300, %v298
        %v304 = vperm.slane %v258, 3
        %v305 = vperm.slane %v259, 3
        %v306 = vmul.f32 %v303, %v304
        %v307 = vmul.f32 %v302, %v305
        %308 = vrot.lane.b32.xlu0 %v256, 127
        %v309 = vpop.permute.xlu0 %308
        %310 = vrot.lane.b32.xlu0 %v257, 127
        %v311 = vpop.permute.xlu0 %310
        %vm312 = vcmp.lt.s32.totalorder %v267, 127
        %v313 = vsel %vm312, %v309, %v311
        %v314 = vsel %vm312, %v311, %v309
        %v315 = vperm.slane %v258, 5
        %v316 = vperm.slane %v259, 5
        %v317 = vmul.f32 %v313, %v315
        %v318 = vmul.f32 %v314, %v316
        %319 = vrot.lane.b32.xlu0 %v256, 113
        %v320 = vpop.permute.xlu0 %319
        %321 = vrot.lane.b32.xlu0 %v257, 113
        %v322 = vpop.permute.xlu0 %321
        %vm323 = vcmp.lt.s32.totalorder %v267, 113
        %v324 = vsel %vm323, %v320, %v322
        %v325 = vsel %vm323, %v322, %v320
        %v326 = vperm.slane %v258, 6
        %v327 = vperm.slane %v259, 6
        %v328 = vmul.f32 %v324, %v326
        %v329 = vmul.f32 %v325, %v327
        %330 = vrot.lane.b32.xlu0 %v256, 112
        %v331 = vpop.permute.xlu0 %330
        %332 = vrot.lane.b32.xlu0 %v257, 112
        %v333 = vpop.permute.xlu0 %332
        %vm334 = vcmp.lt.s32.totalorder %v267, 112
        %v335 = vsel %vm334, %v331, %v333
        %v336 = vsel %vm334, %v333, %v331
        %v337 = vperm.slane %v258, 7
        %v338 = vperm.slane %v259, 7
        %v339 = vmul.f32 %v335, %v337
        %v340 = vmul.f32 %v336, %v338
        %341 = vrot.lane.b32.xlu0 %v256, 111
        %v342 = vpop.permute.xlu0 %341
        %343 = vrot.lane.b32.xlu0 %v257, 111
        %v344 = vpop.permute.xlu0 %343
        %vm345 = vcmp.lt.s32.totalorder %v267, 111
        %v346 = vsel %vm345, %v342, %v344
        %v347 = vsel %vm345, %v344, %v342
        %v348 = vperm.slane %v260, 0
        %v349 = vperm.slane %v261, 0
        %v350 = vmul.f32 %v346, %v348
        %v351 = vmul.f32 %v347, %v349
        %v352 = vld [vmem:[%s212] sm:$0xff]
        %vm353 = vcmask 588800
        %v355 = vsel %vm353, %v352, 0
        %357 = vmatpush.msra.mxu0 0.0
        %358 = vmatpush.msra.mxu0 0.0
        %359 = vmatpush.msra.mxu0 0.0
        %360 = vmatpush.msra.mxu0 0.0
        %361 = vmatpush.msra.mxu0 0.0
        %362 = vmatpush.msra.mxu0 0.0
        %363 = vmatpush.msra.mxu0 0.0
        %364 = vmatpush.msra.mxu0 %v350
        %365 = vmatpush.msra.mxu0 %v339
        %366 = vmatpush.msra.mxu0 %v328
        %367 = vmatpush.msra.mxu0 %v317
        %368 = vmatpush.msra.mxu0 %v256
        %369 = vmatpush.msra.mxu0 %v306
        %370 = vmatpush.msra.mxu0 %v295
        %371 = vmatpush.msra.mxu0 %v284
        %372 = vmatpush.msra.mxu0 %v273
        %373 = vmatmul.f32.gmra.mxu0 %v355
        %v374 = vpop.f32.mrf.mxu0
        %v375 = vadd.f32 0.0, %v374
        %376 = vdwg.mxu0
        %377 = vmatpush.msra.mxu0 0.0
        %378 = vmatpush.msra.mxu0 0.0
        %379 = vmatpush.msra.mxu0 0.0
        %380 = vmatpush.msra.mxu0 0.0
        %381 = vmatpush.msra.mxu0 0.0
        %382 = vmatpush.msra.mxu0 0.0
        %383 = vmatpush.msra.mxu0 0.0
        %384 = vmatpush.msra.mxu0 %v351
        %385 = vmatpush.msra.mxu0 %v340
        %386 = vmatpush.msra.mxu0 %v329
        %387 = vmatpush.msra.mxu0 %v318
        %388 = vmatpush.msra.mxu0 %v257
        %389 = vmatpush.msra.mxu0 %v307
        %390 = vmatpush.msra.mxu0 %v296
        %391 = vmatpush.msra.mxu0 %v285
        %392 = vmatpush.msra.mxu0 %v274
        %393 = vmatmul.f32.gmra.mxu0 %v355
        %v394 = vpop.f32.mrf.mxu0
        %v395 = vadd.f32 0.0, %v394
        %396 = vdwg.mxu0
        %397 = vst [vmem:[%s255] sm:$0xff] %v375
        %398 = vst [vmem:[%s255 + $0x8] sm:$0xff] %v395
        %s399 = sand.u32 %s116, 1
        %s400 = scalar_lea.sflag [#allocation4], %s399
        %s401 = sand.u32 %s116, 1
        %s402 = smul.addr %s401, 16
        %s403 = scalar_lea.vmem [#allocation8], %s402
        // Predicated region
        $region45: #{tpu_custom_call.1} parent=31 // pred_check
          %p404 = pneg %p126
        $region46: #{tpu_custom_call.1} parent=31 // pred_check_branch
          %406 = sbr.rel (%p404) target = $region48
        $region47: #{tpu_custom_call.1} parent=31 // pred_region
          %408 = vsyncadd %s400, 0
          %s409 = smul.addr %s26, 2
          %s410 = smul.addr %s25, 4
          %s411 = sadd.s32 %s409, %s410
          %s412 = smul.addr %s411, 8
          %s413 = scalar_lea.hbm %s3, %s412
          %s415 = sshll.u32 %s403, 4
          %s416 = int_to_ptr.vmem [resolvable:$true] %s415
          %s417 = sshll.u32 %s413, 4
          %s418 = int_to_ptr.hbm [resolvable:$true] %s417
          %420 = dma.vmem_to_hbm [thread:$0]  %s416, 256, %s418, %s400
        $region48: #{tpu_custom_call.1} parent=31 // pred_fallthru
          _
      $region32: #{tpu_custom_call.1} parent=5 // pred_fallthru
        _
      %p421 = scmp.le.s32.totalorder 2, %s16
      // Predicated region
      $region49: #{tpu_custom_call.1} parent=5 // pred_check
        %p422 = pneg %p421
      $region50: #{tpu_custom_call.1} parent=5 // pred_check_branch
        %424 = sbr.rel (%p422) target = $region52
      $region51: #{tpu_custom_call.1} parent=5 // pred_region
        %s425 = ssub.s32 %s16, 2
        // Predicated region
        $region53: #{tpu_custom_call.1} parent=51 // pred_check
          %p426 = pneg %p132
        $region54: #{tpu_custom_call.1} parent=51 // pred_check_branch
          %428 = sbr.rel (%p426) target = $region56
        $region55: #{tpu_custom_call.1} parent=51 // pred_region
          %s429 = sand.u32 %s117, 1
          %s430 = scalar_lea.sflag [#allocation4], %s429
          %s431 = sand.u32 %s117, 1
          %s432 = smul.addr %s431, 16
          %s433 = scalar_lea.vmem [#allocation8], %s432
          %435 = dma.done %s430, 256
        $region56: #{tpu_custom_call.1} parent=51 // pred_fallthru
          _
      $region52: #{tpu_custom_call.1} parent=5 // pred_fallthru
        _
    $region6: #{tpu_custom_call.1} parent=1 // loop_footer
      %s20 = sadd.s32 1, %s16
    $region7: #{tpu_custom_call.1} parent=1 // loop_footer_branch
      %15 = sbr.rel target = $region3
    $region8: #{tpu_custom_call.1} parent=1 // loop_exit
      _
    %436 = vsyncpa [#allocation3], 1
    %s437 = scalar_lea.sflag [#allocation3], 1
    %438 = vsyncpa %s437, 1
    %439 = vsyncpa [#allocation6], 1
    %440 = vsyncpa [#allocation4], 1
    %s441 = scalar_lea.sflag [#allocation4], 1
    %442 = vsyncpa %s441, 1

</llo_original>
